<compile_context>
chip_gen: v7x
topology: tpu7x:2x2x1
jax: 0.10.0
libtpu: 0.0.40
codegen_flags: <defaults>
</compile_context>

<pallas_src>
import jax
import jax.numpy as jnp
from jax.experimental import pallas as pl
from jax.experimental.pallas import tpu as pltpu

INPUT_SIZE = 1
OUTPUT_SIZE = 1

LANE = 128            # vreg lane width
SUBLANE = 8           # vreg sublane count (f32)
BLOCK_ROWS = 2048     # 2048x128 f32 = 1 MiB/tile; in+out double-buffered ~ 4 MiB VMEM
FAST_PATH_ROWS = 64   # <= 8192 elements: pallas_call fixed overhead > actual DMA/compute


def _round_up(x, m):
    return ((x + m - 1) // m) * m


def affine_kernel(x_ref, w_ref, b_ref, o_ref):
    # x_ref: (br, 128) VMEM tile of the flattened batch; w_ref/b_ref: (1,1) scalars in SMEM.
    # Pure VPU fused multiply-add; no MXU involvement.
    w = w_ref[0, 0]
    b = b_ref[0, 0]
    o_ref[...] = x_ref[...] * w + b


def linear_forward(x, weight, bias, *, block_rows=BLOCK_ROWS, force_kernel=False):
    """Forward pass of nn.Linear(1, 1).

    x:      (B, 1)  float32
    weight: (1, 1)  float32 (torch layout (out, in))
    bias:   (1,)    float32
    returns (B, 1)  float32, equal to x @ weight.T + bias
    """
    B, IN = x.shape
    OUT = weight.shape[0]
    assert IN == INPUT_SIZE and OUT == OUTPUT_SIZE, "kernel specialized to 1-in / 1-out linear"
    dtype = x.dtype

    # Note: params are kept in f32 by the caller (torch behavior); cast only for the fma.
    w_scalar = weight.reshape(()).astype(dtype)
    b_scalar = bias.reshape(()).astype(dtype)

    total = B  # IN == OUT == 1 -> the op is elementwise over the batch
    rows = max(1, pl.cdiv(total, LANE))
    rows_padded = _round_up(rows, SUBLANE)           # pad only to a multiple of 8*128 elements

    # ---- small-batch fast path: kernel launch overhead dominates, plain XLA fma wins ----
    if not force_kernel and rows_padded <= FAST_PATH_ROWS:
        return x * w_scalar + b_scalar

    # ---- lane-dense layout, without a scatter: reshape in place or one lax.pad ----
    pad_elems = rows_padded * LANE - total
    if pad_elems == 0:
        x_slab = x.reshape(rows_padded, LANE)                        # no-copy bitcast in XLA
    else:
        x_slab = jnp.pad(x.reshape(-1), (0, pad_elems)).reshape(rows_padded, LANE)

    # ---- block selection: sublane-aligned, capped at half the slab so grid >= 2 steps ----
    half = _round_up(max(1, (rows_padded + 1) // 2), SUBLANE)
    br = min(_round_up(block_rows, SUBLANE), max(SUBLANE, half))
    grid = (pl.cdiv(rows_padded, br),)               # last block may overhang; Pallas masks it

    # Scalars for SMEM (avoid (8,128)-padded VMEM tiles + per-step DMA for 4 bytes each).
    w_s = w_scalar.reshape(1, 1)
    b_s = b_scalar.reshape(1, 1)

    out_slab = pl.pallas_call(
        affine_kernel,
        out_shape=jax.ShapeDtypeStruct((rows_padded, LANE), dtype),
        grid=grid,
        in_specs=[
            pl.BlockSpec((br, LANE), lambda i: (i, 0)),
            pl.BlockSpec(memory_space=pltpu.MemorySpace.SMEM),
            pl.BlockSpec(memory_space=pltpu.MemorySpace.SMEM),
        ],
        out_specs=pl.BlockSpec((br, LANE), lambda i: (i, 0)),
        compiler_params=pltpu.CompilerParams(
            dimension_semantics=("parallel",),      # independent tiles; shards across 2 TCs on v7x
            vmem_limit_bytes=32 * 1024 * 1024,      # explicit: v5e default is 16 MiB; safe on v7x
        ),
    )(x_slab, w_s, b_s)

    if pad_elems == 0:
        return out_slab.reshape(B, OUT)             # aligned path: no tail-slice copy
    return out_slab.reshape(-1)[:total].reshape(B, OUT)


if __name__ == "__main__":
    key = jax.random.PRNGKey(0)
    kx, kw, kb, kx2, kx3 = jax.random.split(key, 5)

    # Deterministic parameter init (mimic nn.Linear uniform(-1/sqrt(in), 1/sqrt(in)))
    bound = 1.0 / jnp.sqrt(jnp.float32(INPUT_SIZE))
    weight = jax.random.uniform(kw, (OUTPUT_SIZE, INPUT_SIZE),
                                minval=-bound, maxval=bound, dtype=jnp.float32)
    bias = jax.random.uniform(kb, (OUTPUT_SIZE,),
                              minval=-bound, maxval=bound, dtype=jnp.float32)

    def ref_fn(xv):
        return xv @ weight.T + bias

    # 1) Small batch, default path (XLA fast path for tiny problems).
    B = 8
    x = jax.random.normal(kx, (B, INPUT_SIZE), dtype=jnp.float32)
    out = jax.block_until_ready(linear_forward(x, weight, bias))
    assert out.shape == (B, OUTPUT_SIZE)
    assert jnp.allclose(out, ref_fn(x), atol=1e-5, rtol=1e-5)

    # 2) Same small batch forced through the Pallas kernel (padded single-block path).
    out_k = jax.block_until_ready(linear_forward(x, weight, bias, force_kernel=True))
    assert jnp.allclose(out_k, ref_fn(x), atol=1e-5, rtol=1e-5)

    # 3) Aligned multi-block path: B = 2048 -> rows = 16, br = 8, grid = (2,), no padding/copy.
    B2 = 2048
    x2 = jax.random.normal(kx2, (B2, INPUT_SIZE), dtype=jnp.float32)
    out2 = jax.block_until_ready(linear_forward(x2, weight, bias, force_kernel=True))
    assert out2.shape == (B2, OUTPUT_SIZE)
    assert jnp.allclose(out2, ref_fn(x2), atol=1e-5, rtol=1e-5)

    # 4) Ragged multi-block path: B = 2053 -> rows_padded = 24, br = 16, grid = (2,),
    #    exercising jnp.pad tail + overhanging (masked) last grid block.
    B3 = 2053
    x3 = jax.random.normal(kx3, (B3, INPUT_SIZE), dtype=jnp.float32)
    out3 = jax.block_until_ready(linear_forward(x3, weight, bias, force_kernel=True))
    assert out3.shape == (B3, OUTPUT_SIZE)
    assert jnp.allclose(out3, ref_fn(x3), atol=1e-5, rtol=1e-5)

    print("KERNEL_OK")
</pallas_src>

<mosaic_0001>
module attributes {stable_mosaic.version = 11 : i64} {
  func.func @affine_kernel(%arg0: i32, %arg1: memref<8x128xf32, #tpu.memory_space<vmem>>, %arg2: memref<1x1xf32, #tpu.memory_space<smem>>, %arg3: memref<1x1xf32, #tpu.memory_space<smem>>, %arg4: memref<8x128xf32, #tpu.memory_space<vmem>>) attributes {dimension_semantics = [#tpu.dimension_semantics<parallel>], iteration_bounds = array<i64: 1>, scalar_prefetch = 0 : i64, scratch_operands = 0 : i64, tpu.core_type = #tpu.core_type<tc>, window_params = [{transform_indices = @transform_0, window_bounds = array<i64: 8, 128>}, {transform_indices = @transform_1, window_bounds = array<i64: 1, 1>}, {transform_indices = @transform_2, window_bounds = array<i64: 1, 1>}, {transform_indices = @transform_3, window_bounds = array<i64: 8, 128>}]} {
    %c0 = arith.constant 0 : index
    %c0_0 = arith.constant 0 : index
    %0 = memref.load %arg2[%c0, %c0_0] : memref<1x1xf32, #tpu.memory_space<smem>>
    %c0_1 = arith.constant 0 : index
    %c0_2 = arith.constant 0 : index
    %1 = memref.load %arg3[%c0_1, %c0_2] : memref<1x1xf32, #tpu.memory_space<smem>>
    %c0_3 = arith.constant 0 : index
    %c0_4 = arith.constant 0 : index
    %2 = vector.load %arg1[%c0_3, %c0_4] : memref<8x128xf32, #tpu.memory_space<vmem>>, vector<8x128xf32>
    %3 = vector.broadcast %0 : f32 to vector<8x128xf32>
    %4 = arith.mulf %2, %3 : vector<8x128xf32>
    %5 = vector.broadcast %1 : f32 to vector<8x128xf32>
    %6 = arith.addf %4, %5 : vector<8x128xf32>
    %c0_5 = arith.constant 0 : index
    %c0_6 = arith.constant 0 : index
    %7 = vector.load %arg4[%c0_5, %c0_6] : memref<8x128xf32, #tpu.memory_space<vmem>>, vector<8x128xf32>
    tpu.vector_store %arg4[%c0_5, %c0_6], %6 {strides = array<i32>} : memref<8x128xf32, #tpu.memory_space<vmem>>, vector<8x128xf32>,
    return
  }
  func.func @transform_0(%arg0: i32) -> (i32, i32) {
    %c0_i32 = arith.constant 0 : i32
    %c0_i32_0 = arith.constant 0 : i32
    return %arg0, %c0_i32 : i32, i32
  }
  func.func @transform_1(%arg0: i32) -> (i32, i32) {
    %c0_i32 = arith.constant 0 : i32
    %c0_i32_0 = arith.constant 0 : i32
    %c0_i32_1 = arith.constant 0 : i32
    return %c0_i32, %c0_i32_0 : i32, i32
  }
  func.func @transform_2(%arg0: i32) -> (i32, i32) {
    %c0_i32 = arith.constant 0 : i32
    %c0_i32_0 = arith.constant 0 : i32
    %c0_i32_1 = arith.constant 0 : i32
    return %c0_i32, %c0_i32_0 : i32, i32
  }
  func.func @transform_3(%arg0: i32) -> (i32, i32) {
    %c0_i32 = arith.constant 0 : i32
    %c0_i32_0 = arith.constant 0 : i32
    return %arg0, %c0_i32 : i32, i32
  }
}

</mosaic_0001>

<llo_original>
// kernel: tpu_custom_call.1
$region0: #{tpu_custom_call.1}
  #allocation0 [shape = 'u32[]', space=smem, size = 0x4, offset = 0x4, fixed_abs, tag = 'smem constant byte address 0x4 - core index']
  #allocation1 [shape = 'u32[144,128]{1,0:T(1,128)}', space=vmem, size = 0x12000, scoped, tag = 'internal scratch']
  #allocation2 [shape = 'f32[1,1]{1,0:T(1,128)S(6)}', space=smem, size = 0x200, scoped, tag = 'scoped memory for tpu_custom_call.1']
  #allocation3 [shape = 'f32[1,1]{1,0:T(1,128)S(6)}', space=smem, size = 0x200, scoped, tag = 'scoped memory for tpu_custom_call.1']
  %s0 = inlined_call_operand.hbm [shape: f32[8,128], index: 0, kind: input, shape index: {}]
  %s1 = inlined_call_operand.<no memory space> [shape: f32[1,1], index: 1, kind: input, shape index: {}]
  %s2 = inlined_call_operand.<no memory space> [shape: f32[1,1], index: 2, kind: input, shape index: {}]
  %s3 = inlined_call_operand.hbm [shape: f32[8,128], index: 3, kind: output, shape index: {}]
  %s4 = sld [smem:[#allocation0]]
  $region26: #{tpu_custom_call.1} parent=0
    _
  %s6 = ssub.s32 1, %s4
  %s7 = scalar_select 0, %s6, %s4
  %8 = sst [smem:[#allocation2]] %s1
  %9 = sst [smem:[#allocation3]] %s2
  $region1: #{tpu_custom_call.1} parent=0
    #allocation4 [shape = 'u8[4096]{0}', space=vmem, size = 0x1000, scoped, tag = 'input window, operand 0, single buffered']
    #allocation5 [shape = 's32[1]{0}', space=sflag, size = 0x4, scoped, tag = 'scoped memory for tpu_custom_call.1']
    #allocation6 [shape = 's32[1]{0}', space=sflag, size = 0x4, scoped, tag = 'scoped memory for tpu_custom_call.1']
    #allocation7 [shape = 'u8[4096]{0}', space=vmem, size = 0x1000, scoped, tag = 'output window, operand 0, single buffered']
    %10 = vsyncpa [#allocation5], 0
    %11 = vsyncpa [#allocation6], 0
    // Predicated region
    $region2: #{tpu_custom_call.1} parent=1 // pred_check
      _
    $region3: #{tpu_custom_call.1} parent=1 // pred_check_branch
      %13 = sbr.rel (0) target = $region5
    $region4: #{tpu_custom_call.1} parent=1 // pred_region
      %s15 = ssub.s32 128, 128
      %16 = vsyncadd [#allocation5], %s15
      %s18 = sshll.u32 [#allocation4], 4
      %s19 = int_to_ptr.vmem [resolvable:$true] %s18
      %21 = dma.hbm_to_vmem [thread:$0]  %s0, 128, %s19, [#allocation5]
    $region5: #{tpu_custom_call.1} parent=1 // pred_fallthru
      _
    // Predicated region
    $region6: #{tpu_custom_call.1} parent=1 // pred_check
      _
    $region7: #{tpu_custom_call.1} parent=1 // pred_check_branch
      %23 = sbr.rel (0) target = $region9
    $region8: #{tpu_custom_call.1} parent=1 // pred_region
      _
    $region9: #{tpu_custom_call.1} parent=1 // pred_fallthru
      _
    // Predicated region
    $region10: #{tpu_custom_call.1} parent=1 // pred_check
      _
    $region11: #{tpu_custom_call.1} parent=1 // pred_check_branch
      %25 = sbr.rel (0) target = $region13
    $region12: #{tpu_custom_call.1} parent=1 // pred_region
      _
    $region13: #{tpu_custom_call.1} parent=1 // pred_fallthru
      _
    // Predicated region
    $region14: #{tpu_custom_call.1} parent=1 // pred_check
      _
    $region15: #{tpu_custom_call.1} parent=1 // pred_check_branch
      %27 = sbr.rel (0) target = $region17
    $region16: #{tpu_custom_call.1} parent=1 // pred_region
      %28 = dma.done [#allocation5], 128
    $region17: #{tpu_custom_call.1} parent=1 // pred_fallthru
      _
    %s29 = sld [smem:[#allocation2]]
    %s30 = sld [smem:[#allocation3]]
    %v31 = vld [vmem:[#allocation4] sm:$0xff]
    %v32 = vstv %s29
    %v33 = vmul.f32 %v31, %v32
    %v34 = vstv %s30
    %v35 = vadd.f32 %v33, %v34
    %36 = vst [vmem:[#allocation7] sm:$0xff] %v35
    // Predicated region
    $region18: #{tpu_custom_call.1} parent=1 // pred_check
      _
    $region19: #{tpu_custom_call.1} parent=1 // pred_check_branch
      %38 = sbr.rel (0) target = $region21
    $region20: #{tpu_custom_call.1} parent=1 // pred_region
      %s40 = ssub.s32 128, 128
      %41 = vsyncadd [#allocation6], %s40
      %s43 = sshll.u32 [#allocation7], 4
      %s44 = int_to_ptr.vmem [resolvable:$true] %s43
      %46 = dma.vmem_to_hbm [thread:$0]  %s44, 128, %s3, [#allocation6]
    $region21: #{tpu_custom_call.1} parent=1 // pred_fallthru
      _
    // Predicated region
    $region22: #{tpu_custom_call.1} parent=1 // pred_check
      _
    $region23: #{tpu_custom_call.1} parent=1 // pred_check_branch
      %48 = sbr.rel (0) target = $region25
    $region24: #{tpu_custom_call.1} parent=1 // pred_region
      %49 = dma.done [#allocation6], 128
    $region25: #{tpu_custom_call.1} parent=1 // pred_fallthru
      _
    %50 = vsyncpa [#allocation5], 1
    %51 = vsyncpa [#allocation6], 1

</llo_original>
